<compile_context>
chip_gen: v6e
topology: v6e:2x2x1
jax: 0.10.0
libtpu: 0.0.40
codegen_flags: <defaults>
</compile_context>

<pallas_src>
import functools

import jax
import jax.numpy as jnp
from jax.experimental import pallas as pl
from jax.experimental.pallas import tpu as pltpu


def _replication_pad2d_kernel(x_ref, o_ref, *, padding):
    """Edge-pad a block of (TBC, H, W) planes into (TBC, H_out, W_out).

    Padding amounts are static Python ints, so all slices below are static.
    The output is produced with direct region stores: interior first, then the
    thin left/right borders, then top/bottom rows replicated from the already
    width-padded edge rows (never reads uninitialized output regions).
    """
    pad_l, pad_r, pad_t, pad_b = padding
    tbc, H, W = x_ref.shape
    _, H_out, W_out = o_ref.shape

    x = x_ref[...]  # (TBC, H, W)

    # 1) Interior: one wide store of the original plane at its padded offset.
    o_ref[:, pad_t:pad_t + H, pad_l:pad_l + W] = x

    # 2) Left / right borders: thin (lane-masked) stores of the edge columns.
    if pad_l > 0:
        left = jnp.broadcast_to(x[:, :, 0:1], (tbc, H, pad_l))
        o_ref[:, pad_t:pad_t + H, 0:pad_l] = left
    if pad_r > 0:
        right = jnp.broadcast_to(x[:, :, W - 1:W], (tbc, H, pad_r))
        o_ref[:, pad_t:pad_t + H, pad_l + W:W_out] = right

    # 3) Top / bottom rows: replicate the already width-padded edge rows
    #    written above (full W_out-wide stores, includes the corners).
    if pad_t > 0:
        top_row = o_ref[:, pad_t:pad_t + 1, :]
        o_ref[:, 0:pad_t, :] = jnp.broadcast_to(top_row, (tbc, pad_t, W_out))
    if pad_b > 0:
        bot_row = o_ref[:, pad_t + H - 1:pad_t + H, :]
        o_ref[:, pad_t + H:H_out, :] = jnp.broadcast_to(
            bot_row, (tbc, pad_b, W_out)
        )


# Double-buffered (input + output) block budget. Conservative enough for
# v7x (64 MiB physical / 32 MiB scoped default) while still yielding large,
# DMA-friendly blocks on v5e / v6e (128 MiB VMEM).
_VMEM_BLOCK_BUDGET_BYTES = 24 * 1024 * 1024


def replication_pad2d(x, padding, *, max_block_bc=None):
    """Pallas TPU implementation of ReplicationPad2D.forward.

    Args:
        x: (B, C, H, W) array.
        padding: int or 4-tuple (left, right, top, bottom), all >= 0.
        max_block_bc: optional cap on planes per grid step (testing knob).
    Returns:
        (B, C, H + top + bottom, W + left + right) array, same dtype as x.
    """
    if isinstance(padding, int):
        padding = (padding, padding, padding, padding)
    elif not (isinstance(padding, tuple) and len(padding) == 4):
        raise ValueError("Padding must be an int or a 4-tuple")
    if min(padding) < 0:
        raise ValueError("Padding values must be non-negative")

    pad_l, pad_r, pad_t, pad_b = padding
    B, C, H, W = x.shape
    H_out = H + pad_t + pad_b
    W_out = W + pad_l + pad_r
    BC = B * C

    # Free metadata reshape for contiguous NCHW: batch many (b, c) planes per
    # grid step instead of one plane per step.
    x_flat = x.reshape(BC, H, W)

    # Largest per-step plane count that keeps the double-buffered in+out
    # blocks inside the VMEM budget.
    itemsize = jnp.dtype(x.dtype).itemsize
    bytes_per_plane = (H * W + H_out * W_out) * itemsize
    tbc = max(1, _VMEM_BLOCK_BUDGET_BYTES // (2 * bytes_per_plane))
    tbc = int(min(tbc, BC))
    if max_block_bc is not None:
        tbc = int(min(tbc, max_block_bc))

    kernel = functools.partial(_replication_pad2d_kernel, padding=padding)

    out_flat = pl.pallas_call(
        kernel,
        out_shape=jax.ShapeDtypeStruct((BC, H_out, W_out), x.dtype),
        grid=(pl.cdiv(BC, tbc),),
        in_specs=[pl.BlockSpec((tbc, H, W), lambda i: (i, 0, 0))],
        out_specs=pl.BlockSpec((tbc, H_out, W_out), lambda i: (i, 0, 0)),
        compiler_params=pltpu.CompilerParams(
            dimension_semantics=("parallel",),
            vmem_limit_bytes=48 * 1024 * 1024,
        ),
    )(x_flat)

    return out_flat.reshape(B, C, H_out, W_out)


if __name__ == "__main__":
    key = jax.random.PRNGKey(0)
    B, C, H, W = 2, 4, 16, 16
    x = jax.random.normal(key, (B, C, H, W), dtype=jnp.float32)

    # Asymmetric padding (left, right, top, bottom) exercises all branches.
    padding = (1, 2, 3, 4)
    out = jax.block_until_ready(replication_pad2d(x, padding))
    pad_l, pad_r, pad_t, pad_b = padding
    ref = jnp.pad(
        x, ((0, 0), (0, 0), (pad_t, pad_b), (pad_l, pad_r)), mode="edge"
    )
    assert out.shape == (B, C, H + pad_t + pad_b, W + pad_l + pad_r), out.shape
    assert out.dtype == x.dtype
    assert jnp.array_equal(out, ref), "Pallas output mismatch vs reference"

    # Int-padding path.
    out2 = jax.block_until_ready(replication_pad2d(x, 2))
    ref2 = jnp.pad(x, ((0, 0), (0, 0), (2, 2), (2, 2)), mode="edge")
    assert jnp.array_equal(out2, ref2)

    # Multi-step grid with a partial trailing block (BC=6, TBC capped at 4),
    # plus a zero pad on one side.
    x3 = jax.random.normal(jax.random.PRNGKey(1), (2, 3, 8, 8), jnp.float32)
    out3 = jax.block_until_ready(
        replication_pad2d(x3, (2, 1, 0, 3), max_block_bc=4)
    )
    ref3 = jnp.pad(x3, ((0, 0), (0, 0), (0, 3), (2, 1)), mode="edge")
    assert jnp.array_equal(out3, ref3)

    print("KERNEL_OK")
</pallas_src>

<mosaic_0001>
module attributes {stable_mosaic.version = 11 : i64} {
  func.func @_replication_pad2d_kernel(%arg0: i32, %arg1: memref<8x16x16xf32, #tpu.memory_space<vmem>>, %arg2: memref<8x23x19xf32, #tpu.memory_space<vmem>>) attributes {dimension_semantics = [#tpu.dimension_semantics<parallel>], iteration_bounds = array<i64: 1>, scalar_prefetch = 0 : i64, scratch_operands = 0 : i64, tpu.core_type = #tpu.core_type<tc>, window_params = [{transform_indices = @transform_0, window_bounds = array<i64: 8, 16, 16>}, {transform_indices = @transform_1, window_bounds = array<i64: 8, 23, 19>}]} {
    %c0 = arith.constant 0 : index
    %c0_0 = arith.constant 0 : index
    %c0_1 = arith.constant 0 : index
    %0 = vector.load %arg1[%c0, %c0_0, %c0_1] : memref<8x16x16xf32, #tpu.memory_space<vmem>>, vector<8x16x16xf32>
    %c0_2 = arith.constant 0 : index
    %c3 = arith.constant 3 : index
    %c1 = arith.constant 1 : index
    %1 = vector.load %arg2[%c0_2, %c3, %c1] : memref<8x23x19xf32, #tpu.memory_space<vmem>>, vector<8x16x16xf32>
    tpu.vector_store %arg2[%c0_2, %c3, %c1], %0 {strides = array<i32>} : memref<8x23x19xf32, #tpu.memory_space<vmem>>, vector<8x16x16xf32>,
    %2 = vector.extract_strided_slice %0 {offsets = [0, 0, 0], sizes = [8, 16, 1], strides = [1, 1, 1]} : vector<8x16x16xf32> to vector<8x16x1xf32>
    %c0_3 = arith.constant 0 : index
    %c3_4 = arith.constant 3 : index
    %c0_5 = arith.constant 0 : index
    %3 = vector.load %arg2[%c0_3, %c3_4, %c0_5] : memref<8x23x19xf32, #tpu.memory_space<vmem>>, vector<8x16x1xf32>
    tpu.vector_store %arg2[%c0_3, %c3_4, %c0_5], %2 {strides = array<i32>} : memref<8x23x19xf32, #tpu.memory_space<vmem>>, vector<8x16x1xf32>,
    %4 = vector.extract_strided_slice %0 {offsets = [0, 0, 15], sizes = [8, 16, 1], strides = [1, 1, 1]} : vector<8x16x16xf32> to vector<8x16x1xf32>
    %5 = vector.shape_cast %4 : vector<8x16x1xf32> to vector<8x16x1xf32>
    %6 = vector.broadcast %5 : vector<8x16x1xf32> to vector<8x16x2xf32>
    %c0_6 = arith.constant 0 : index
    %c3_7 = arith.constant 3 : index
    %c17 = arith.constant 17 : index
    %7 = vector.load %arg2[%c0_6, %c3_7, %c17] : memref<8x23x19xf32, #tpu.memory_space<vmem>>, vector<8x16x2xf32>
    tpu.vector_store %arg2[%c0_6, %c3_7, %c17], %6 {strides = array<i32>} : memref<8x23x19xf32, #tpu.memory_space<vmem>>, vector<8x16x2xf32>,
    %c0_8 = arith.constant 0 : index
    %c3_9 = arith.constant 3 : index
    %c0_10 = arith.constant 0 : index
    %8 = vector.load %arg2[%c0_8, %c3_9, %c0_10] : memref<8x23x19xf32, #tpu.memory_space<vmem>>, vector<8x1x19xf32>
    %9 = vector.shape_cast %8 : vector<8x1x19xf32> to vector<8x1x19xf32>
    %10 = vector.broadcast %9 : vector<8x1x19xf32> to vector<8x3x19xf32>
    %c0_11 = arith.constant 0 : index
    %c0_12 = arith.constant 0 : index
    %c0_13 = arith.constant 0 : index
    %11 = vector.load %arg2[%c0_11, %c0_12, %c0_13] : memref<8x23x19xf32, #tpu.memory_space<vmem>>, vector<8x3x19xf32>
    tpu.vector_store %arg2[%c0_11, %c0_12, %c0_13], %10 {strides = array<i32>} : memref<8x23x19xf32, #tpu.memory_space<vmem>>, vector<8x3x19xf32>,
    %c0_14 = arith.constant 0 : index
    %c18 = arith.constant 18 : index
    %c0_15 = arith.constant 0 : index
    %12 = vector.load %arg2[%c0_14, %c18, %c0_15] : memref<8x23x19xf32, #tpu.memory_space<vmem>>, vector<8x1x19xf32>
    %13 = vector.shape_cast %12 : vector<8x1x19xf32> to vector<8x1x19xf32>
    %14 = vector.broadcast %13 : vector<8x1x19xf32> to vector<8x4x19xf32>
    %c0_16 = arith.constant 0 : index
    %c19 = arith.constant 19 : index
    %c0_17 = arith.constant 0 : index
    %15 = vector.load %arg2[%c0_16, %c19, %c0_17] : memref<8x23x19xf32, #tpu.memory_space<vmem>>, vector<8x4x19xf32>
    tpu.vector_store %arg2[%c0_16, %c19, %c0_17], %14 {strides = array<i32>} : memref<8x23x19xf32, #tpu.memory_space<vmem>>, vector<8x4x19xf32>,
    return
  }
  func.func @transform_0(%arg0: i32) -> (i32, i32, i32) {
    %c0_i32 = arith.constant 0 : i32
    %c0_i32_0 = arith.constant 0 : i32
    %c0_i32_1 = arith.constant 0 : i32
    return %arg0, %c0_i32, %c0_i32_0 : i32, i32, i32
  }
  func.func @transform_1(%arg0: i32) -> (i32, i32, i32) {
    %c0_i32 = arith.constant 0 : i32
    %c0_i32_0 = arith.constant 0 : i32
    %c0_i32_1 = arith.constant 0 : i32
    return %arg0, %c0_i32, %c0_i32_0 : i32, i32, i32
  }
}

</mosaic_0001>

<llo_original>
// kernel: tpu_custom_call.1
$region0: #{tpu_custom_call.1}
  #allocation0 [shape = 'u32[]', space=smem, size = 0x4, offset = 0x4, fixed_abs, tag = 'smem constant byte address 0x4 - core index']
  #allocation1 [shape = 'u32[144,128]{1,0:T(1,128)}', space=vmem, size = 0x12000, scoped, tag = 'internal scratch']
  %s0 = inlined_call_operand.hbm [shape: f32[8,16,16], index: 0, kind: input, shape index: {}]
  %s1 = inlined_call_operand.vmem [shape: f32[8,23,19], index: 1, kind: output, shape index: {}]
  %s2 = sld [smem:[#allocation0]]
  $region18: #{tpu_custom_call.1} parent=0
    _
  %s4 = ssub.s32 1, %s2
  %s5 = scalar_select 0, %s4, %s2
  $region1: #{tpu_custom_call.1} parent=0
    #allocation2 [shape = 'u8[65536]{0}', space=vmem, size = 0x10000, scoped, tag = 'input window, operand 0, single buffered']
    #allocation3 [shape = 's32[1]{0}', space=sflag, size = 0x4, scoped, tag = 'scoped memory for tpu_custom_call.1']
    %6 = vsyncpa [#allocation3], 0
    // Predicated region
    $region2: #{tpu_custom_call.1} parent=1 // pred_check
      _
    $region3: #{tpu_custom_call.1} parent=1 // pred_check_branch
      %8 = sbr.rel (0) target = $region5
    $region4: #{tpu_custom_call.1} parent=1 // pred_region
      %s10 = ssub.s32 2048, 2048
      %11 = vsyncadd [#allocation3], %s10
      %s12 = sshll.u32 [#allocation2], 4
      %s13 = int_to_ptr.vmem [resolvable:$true] %s12
      %18 = dma.hbm_to_vmem [thread:$0]  %s0, 2048, %s13, [#allocation3], 128, 128, 8
    $region5: #{tpu_custom_call.1} parent=1 // pred_fallthru
      _
    // Predicated region
    $region6: #{tpu_custom_call.1} parent=1 // pred_check
      _
    $region7: #{tpu_custom_call.1} parent=1 // pred_check_branch
      %20 = sbr.rel (0) target = $region9
    $region8: #{tpu_custom_call.1} parent=1 // pred_region
      %21 = dma.done [#allocation3], 2048
    $region9: #{tpu_custom_call.1} parent=1 // pred_fallthru
      _
    %v22 = vld [vmem:[#allocation2] sm:$0xff]
    %v23 = vld [vmem:[#allocation2 + $0x8] sm:$0xff]
    %v24 = vld [vmem:[#allocation2 + $0x10] sm:$0xff]
    %v25 = vld [vmem:[#allocation2 + $0x18] sm:$0xff]
    %v26 = vld [vmem:[#allocation2 + $0x20] sm:$0xff]
    %v27 = vld [vmem:[#allocation2 + $0x28] sm:$0xff]
    %v28 = vld [vmem:[#allocation2 + $0x30] sm:$0xff]
    %v29 = vld [vmem:[#allocation2 + $0x38] sm:$0xff]
    %v30 = vld [vmem:[#allocation2 + $0x40] sm:$0xff]
    %v31 = vld [vmem:[#allocation2 + $0x48] sm:$0xff]
    %v32 = vld [vmem:[#allocation2 + $0x50] sm:$0xff]
    %v33 = vld [vmem:[#allocation2 + $0x58] sm:$0xff]
    %v34 = vld [vmem:[#allocation2 + $0x60] sm:$0xff]
    %v35 = vld [vmem:[#allocation2 + $0x68] sm:$0xff]
    %v36 = vld [vmem:[#allocation2 + $0x70] sm:$0xff]
    %v37 = vld [vmem:[#allocation2 + $0x78] sm:$0xff]
    %54 = vrot.lane.b32.xlu0 %v22, 1
    %v55 = vpop.permute.xlu0 %54
    %56 = vrot.lane.b32.xlu0 %v23, 1
    %v57 = vpop.permute.xlu0 %56
    %58 = vrot.lane.b32.xlu0 %v24, 1
    %v59 = vpop.permute.xlu0 %58
    %60 = vrot.lane.b32.xlu0 %v25, 1
    %v61 = vpop.permute.xlu0 %60
    %62 = vrot.lane.b32.xlu0 %v26, 1
    %v63 = vpop.permute.xlu0 %62
    %64 = vrot.lane.b32.xlu0 %v27, 1
    %v65 = vpop.permute.xlu0 %64
    %66 = vrot.lane.b32.xlu0 %v28, 1
    %v67 = vpop.permute.xlu0 %66
    %68 = vrot.lane.b32.xlu0 %v29, 1
    %v69 = vpop.permute.xlu0 %68
    %70 = vrot.lane.b32.xlu0 %v30, 1
    %v71 = vpop.permute.xlu0 %70
    %72 = vrot.lane.b32.xlu0 %v31, 1
    %v73 = vpop.permute.xlu0 %72
    %74 = vrot.lane.b32.xlu0 %v32, 1
    %v75 = vpop.permute.xlu0 %74
    %76 = vrot.lane.b32.xlu0 %v33, 1
    %v77 = vpop.permute.xlu0 %76
    %78 = vrot.lane.b32.xlu0 %v34, 1
    %v79 = vpop.permute.xlu0 %78
    %80 = vrot.lane.b32.xlu0 %v35, 1
    %v81 = vpop.permute.xlu0 %80
    %82 = vrot.lane.b32.xlu0 %v36, 1
    %v83 = vpop.permute.xlu0 %82
    %84 = vrot.lane.b32.xlu0 %v37, 1
    %v85 = vpop.permute.xlu0 %84
    %vm102 = vcmask 138248
    %103 = vst.msk [vmem:[%s1 + $0x3] sm:$0xff] %vm102, %v55
    %104 = vst.msk [vmem:[%s1 + $0xb] sm:$0xff] %vm102, %v57
    %105 = vst.msk [vmem:[%s1 + $0x1b] sm:$0xff] %vm102, %v59
    %106 = vst.msk [vmem:[%s1 + $0x23] sm:$0xff] %vm102, %v61
    %107 = vst.msk [vmem:[%s1 + $0x33] sm:$0xff] %vm102, %v63
    %108 = vst.msk [vmem:[%s1 + $0x3b] sm:$0xff] %vm102, %v65
    %109 = vst.msk [vmem:[%s1 + $0x4b] sm:$0xff] %vm102, %v67
    %110 = vst.msk [vmem:[%s1 + $0x53] sm:$0xff] %vm102, %v69
    %111 = vst.msk [vmem:[%s1 + $0x63] sm:$0xff] %vm102, %v71
    %112 = vst.msk [vmem:[%s1 + $0x6b] sm:$0xff] %vm102, %v73
    %113 = vst.msk [vmem:[%s1 + $0x7b] sm:$0xff] %vm102, %v75
    %114 = vst.msk [vmem:[%s1 + $0x83] sm:$0xff] %vm102, %v77
    %115 = vst.msk [vmem:[%s1 + $0x93] sm:$0xff] %vm102, %v79
    %116 = vst.msk [vmem:[%s1 + $0x9b] sm:$0xff] %vm102, %v81
    %117 = vst.msk [vmem:[%s1 + $0xab] sm:$0xff] %vm102, %v83
    %118 = vst.msk [vmem:[%s1 + $0xb3] sm:$0xff] %vm102, %v85
    %vm119 = vcmask 7168
    %120 = vst.msk [vmem:[%s1 + $0x3] sm:$0xff] %vm119, %v22
    %121 = vst.msk [vmem:[%s1 + $0xb] sm:$0xff] %vm119, %v23
    %122 = vst.msk [vmem:[%s1 + $0x1b] sm:$0xff] %vm119, %v24
    %123 = vst.msk [vmem:[%s1 + $0x23] sm:$0xff] %vm119, %v25
    %124 = vst.msk [vmem:[%s1 + $0x33] sm:$0xff] %vm119, %v26
    %125 = vst.msk [vmem:[%s1 + $0x3b] sm:$0xff] %vm119, %v27
    %126 = vst.msk [vmem:[%s1 + $0x4b] sm:$0xff] %vm119, %v28
    %127 = vst.msk [vmem:[%s1 + $0x53] sm:$0xff] %vm119, %v29
    %128 = vst.msk [vmem:[%s1 + $0x63] sm:$0xff] %vm119, %v30
    %129 = vst.msk [vmem:[%s1 + $0x6b] sm:$0xff] %vm119, %v31
    %130 = vst.msk [vmem:[%s1 + $0x7b] sm:$0xff] %vm119, %v32
    %131 = vst.msk [vmem:[%s1 + $0x83] sm:$0xff] %vm119, %v33
    %132 = vst.msk [vmem:[%s1 + $0x93] sm:$0xff] %vm119, %v34
    %133 = vst.msk [vmem:[%s1 + $0x9b] sm:$0xff] %vm119, %v35
    %134 = vst.msk [vmem:[%s1 + $0xab] sm:$0xff] %vm119, %v36
    %135 = vst.msk [vmem:[%s1 + $0xb3] sm:$0xff] %vm119, %v37
    %136 = vset.pattern.permute.xlu0 15
    %137 = vperm.xlu0 %136, %v22
    %v138 = vpop.permute.xlu0 %137
    %140 = vset.pattern.permute.xlu0 15
    %141 = vperm.xlu0 %140, %v23
    %v142 = vpop.permute.xlu0 %141
    %144 = vset.pattern.permute.xlu0 15
    %145 = vperm.xlu0 %144, %v24
    %v146 = vpop.permute.xlu0 %145
    %148 = vset.pattern.permute.xlu0 15
    %149 = vperm.xlu0 %148, %v25
    %v150 = vpop.permute.xlu0 %149
    %152 = vset.pattern.permute.xlu0 15
    %153 = vperm.xlu0 %152, %v26
    %v154 = vpop.permute.xlu0 %153
    %156 = vset.pattern.permute.xlu0 15
    %157 = vperm.xlu0 %156, %v27
    %v158 = vpop.permute.xlu0 %157
    %160 = vset.pattern.permute.xlu0 15
    %161 = vperm.xlu0 %160, %v28
    %v162 = vpop.permute.xlu0 %161
    %164 = vset.pattern.permute.xlu0 15
    %165 = vperm.xlu0 %164, %v29
    %v166 = vpop.permute.xlu0 %165
    %168 = vset.pattern.permute.xlu0 15
    %169 = vperm.xlu0 %168, %v30
    %v170 = vpop.permute.xlu0 %169
    %172 = vset.pattern.permute.xlu0 15
    %173 = vperm.xlu0 %172, %v31
    %v174 = vpop.permute.xlu0 %173
    %176 = vset.pattern.permute.xlu0 15
    %177 = vperm.xlu0 %176, %v32
    %v178 = vpop.permute.xlu0 %177
    %180 = vset.pattern.permute.xlu0 15
    %181 = vperm.xlu0 %180, %v33
    %v182 = vpop.permute.xlu0 %181
    %184 = vset.pattern.permute.xlu0 15
    %185 = vperm.xlu0 %184, %v34
    %v186 = vpop.permute.xlu0 %185
    %188 = vset.pattern.permute.xlu0 15
    %189 = vperm.xlu0 %188, %v35
    %v190 = vpop.permute.xlu0 %189
    %192 = vset.pattern.permute.xlu0 15
    %193 = vperm.xlu0 %192, %v36
    %v194 = vpop.permute.xlu0 %193
    %196 = vset.pattern.permute.xlu0 15
    %197 = vperm.xlu0 %196, %v37
    %v198 = vpop.permute.xlu0 %197
    %vm200 = vcmask 154760
    %201 = vst.msk [vmem:[%s1 + $0x3] sm:$0xff] %vm200, %v138
    %202 = vst.msk [vmem:[%s1 + $0xb] sm:$0xff] %vm200, %v142
    %203 = vst.msk [vmem:[%s1 + $0x1b] sm:$0xff] %vm200, %v146
    %204 = vst.msk [vmem:[%s1 + $0x23] sm:$0xff] %vm200, %v150
    %205 = vst.msk [vmem:[%s1 + $0x33] sm:$0xff] %vm200, %v154
    %206 = vst.msk [vmem:[%s1 + $0x3b] sm:$0xff] %vm200, %v158
    %207 = vst.msk [vmem:[%s1 + $0x4b] sm:$0xff] %vm200, %v162
    %208 = vst.msk [vmem:[%s1 + $0x53] sm:$0xff] %vm200, %v166
    %209 = vst.msk [vmem:[%s1 + $0x63] sm:$0xff] %vm200, %v170
    %210 = vst.msk [vmem:[%s1 + $0x6b] sm:$0xff] %vm200, %v174
    %211 = vst.msk [vmem:[%s1 + $0x7b] sm:$0xff] %vm200, %v178
    %212 = vst.msk [vmem:[%s1 + $0x83] sm:$0xff] %vm200, %v182
    %213 = vst.msk [vmem:[%s1 + $0x93] sm:$0xff] %vm200, %v186
    %214 = vst.msk [vmem:[%s1 + $0x9b] sm:$0xff] %vm200, %v190
    %215 = vst.msk [vmem:[%s1 + $0xab] sm:$0xff] %vm200, %v194
    %216 = vst.msk [vmem:[%s1 + $0xb3] sm:$0xff] %vm200, %v198
    %v217 = vld [vmem:[%s1 + $0x3] sm:$0x1]
    %v218 = vld [vmem:[%s1 + $0x1b] sm:$0x1]
    %v219 = vld [vmem:[%s1 + $0x33] sm:$0x1]
    %v220 = vld [vmem:[%s1 + $0x4b] sm:$0x1]
    %v221 = vld [vmem:[%s1 + $0x63] sm:$0x1]
    %v222 = vld [vmem:[%s1 + $0x7b] sm:$0x1]
    %v223 = vld [vmem:[%s1 + $0x93] sm:$0x1]
    %v224 = vld [vmem:[%s1 + $0xab] sm:$0x1]
    %v225 = vlaneseq
    %v226 = vshrl.u32 %v225, 7
    %v227 = vsub.s32 0, %v226
    %v228 = vrot.slane %v217, %v227
    %v229 = vlaneseq
    %v230 = vshrl.u32 %v229, 7
    %v231 = vsub.s32 0, %v230
    %v232 = vrot.slane %v218, %v231
    %v233 = vlaneseq
    %v234 = vshrl.u32 %v233, 7
    %v235 = vsub.s32 0, %v234
    %v236 = vrot.slane %v219, %v235
    %v237 = vlaneseq
    %v238 = vshrl.u32 %v237, 7
    %v239 = vsub.s32 0, %v238
    %v240 = vrot.slane %v220, %v239
    %v241 = vlaneseq
    %v242 = vshrl.u32 %v241, 7
    %v243 = vsub.s32 0, %v242
    %v244 = vrot.slane %v221, %v243
    %v245 = vlaneseq
    %v246 = vshrl.u32 %v245, 7
    %v247 = vsub.s32 0, %v246
    %v248 = vrot.slane %v222, %v247
    %v249 = vlaneseq
    %v250 = vshrl.u32 %v249, 7
    %v251 = vsub.s32 0, %v250
    %v252 = vrot.slane %v223, %v251
    %v253 = vlaneseq
    %v254 = vshrl.u32 %v253, 7
    %v255 = vsub.s32 0, %v254
    %v256 = vrot.slane %v224, %v255
    %vm257 = vcmask 149504
    %258 = vst.msk [vmem:[%s1] sm:$0x7] %vm257, %v228
    %259 = vst.msk [vmem:[%s1 + $0x18] sm:$0x7] %vm257, %v232
    %260 = vst.msk [vmem:[%s1 + $0x30] sm:$0x7] %vm257, %v236
    %261 = vst.msk [vmem:[%s1 + $0x48] sm:$0x7] %vm257, %v240
    %262 = vst.msk [vmem:[%s1 + $0x60] sm:$0x7] %vm257, %v244
    %263 = vst.msk [vmem:[%s1 + $0x78] sm:$0x7] %vm257, %v248
    %264 = vst.msk [vmem:[%s1 + $0x90] sm:$0x7] %vm257, %v252
    %265 = vst.msk [vmem:[%s1 + $0xa8] sm:$0x7] %vm257, %v256
    %v266 = vld [vmem:[%s1 + $0x12] sm:$0x1]
    %v267 = vld [vmem:[%s1 + $0x2a] sm:$0x1]
    %v268 = vld [vmem:[%s1 + $0x42] sm:$0x1]
    %v269 = vld [vmem:[%s1 + $0x5a] sm:$0x1]
    %v270 = vld [vmem:[%s1 + $0x72] sm:$0x1]
    %v271 = vld [vmem:[%s1 + $0x8a] sm:$0x1]
    %v272 = vld [vmem:[%s1 + $0xa2] sm:$0x1]
    %v273 = vld [vmem:[%s1 + $0xba] sm:$0x1]
    %v274 = vlaneseq
    %v275 = vshrl.u32 %v274, 7
    %v276 = vsub.s32 0, %v275
    %v277 = vrot.slane %v266, %v276
    %v278 = vlaneseq
    %v279 = vshrl.u32 %v278, 7
    %v280 = vsub.s32 0, %v279
    %v281 = vrot.slane %v267, %v280
    %v282 = vlaneseq
    %v283 = vshrl.u32 %v282, 7
    %v284 = vsub.s32 0, %v283
    %v285 = vrot.slane %v268, %v284
    %v286 = vlaneseq
    %v287 = vshrl.u32 %v286, 7
    %v288 = vsub.s32 0, %v287
    %v289 = vrot.slane %v269, %v288
    %v290 = vlaneseq
    %v291 = vshrl.u32 %v290, 7
    %v292 = vsub.s32 0, %v291
    %v293 = vrot.slane %v270, %v292
    %v294 = vlaneseq
    %v295 = vshrl.u32 %v294, 7
    %v296 = vsub.s32 0, %v295
    %v297 = vrot.slane %v271, %v296
    %v298 = vlaneseq
    %v299 = vshrl.u32 %v298, 7
    %v300 = vsub.s32 0, %v299
    %v301 = vrot.slane %v272, %v300
    %v302 = vlaneseq
    %v303 = vshrl.u32 %v302, 7
    %v304 = vsub.s32 0, %v303
    %v305 = vrot.slane %v273, %v304
    %vm306 = vcmask 150528
    %307 = vst.msk [vmem:[%s1 + $0x13] sm:$0xf] %vm306, %v277
    %308 = vst.msk [vmem:[%s1 + $0x2b] sm:$0xf] %vm306, %v281
    %309 = vst.msk [vmem:[%s1 + $0x43] sm:$0xf] %vm306, %v285
    %310 = vst.msk [vmem:[%s1 + $0x5b] sm:$0xf] %vm306, %v289
    %311 = vst.msk [vmem:[%s1 + $0x73] sm:$0xf] %vm306, %v293
    %312 = vst.msk [vmem:[%s1 + $0x8b] sm:$0xf] %vm306, %v297
    %313 = vst.msk [vmem:[%s1 + $0xa3] sm:$0xf] %vm306, %v301
    %314 = vst.msk [vmem:[%s1 + $0xbb] sm:$0xf] %vm306, %v305
    // Predicated region
    $region10: #{tpu_custom_call.1} parent=1 // pred_check
      _
    $region11: #{tpu_custom_call.1} parent=1 // pred_check_branch
      %316 = sbr.rel (0) target = $region13
    $region12: #{tpu_custom_call.1} parent=1 // pred_region
      _
    $region13: #{tpu_custom_call.1} parent=1 // pred_fallthru
      _
    // Predicated region
    $region14: #{tpu_custom_call.1} parent=1 // pred_check
      _
    $region15: #{tpu_custom_call.1} parent=1 // pred_check_branch
      %318 = sbr.rel (0) target = $region17
    $region16: #{tpu_custom_call.1} parent=1 // pred_region
      _
    $region17: #{tpu_custom_call.1} parent=1 // pred_fallthru
      _
    %319 = vsyncpa [#allocation3], 1

</llo_original>
